<compile_context>
chip_gen: v5e
topology: v5e:2x2
jax: 0.10.0
libtpu: 0.0.40
codegen_flags: <defaults>
</compile_context>

<pallas_src>
import jax
import jax.numpy as jnp
import numpy as np
from jax import lax
from jax.experimental import pallas as pl
from jax.experimental.pallas import tpu as pltpu


# ------------------------------------------------------------------ helpers
def _round_up(x, m):
    return ((x + m - 1) // m) * m


def _pick_tile(dim, target, quantum):
    """Largest multiple of `quantum` that divides `dim` and is <= target.
    `dim` is always a multiple of `quantum` here, so this never fails."""
    if dim <= target:
        return dim
    t = (target // quantum) * quantum
    while t >= quantum:
        if dim % t == 0:
            return t
        t -= quantum
    return quantum


# ------------------------------------------------------------------- kernel
def _linear_kernel(x_ref, w_ref, o_ref):
    # x: (tm, tk) bf16, w: (tn, tk) bf16 (torch [out, in] layout), o: (tm, tn) f32.
    # Contract the last (in_features) dim of both operands on the MXU; this is
    # the native transposed-RHS matmul path, no per-tile XLU transpose.
    partial = lax.dot_general(
        x_ref[...], w_ref[...],
        dimension_numbers=(((1,), (1,)), ((), ())),
        preferred_element_type=jnp.float32)

    @pl.when(pl.program_id(2) == 0)
    def _():
        o_ref[...] = partial            # first K step: overwrite (no zero-init pass)

    @pl.when(pl.program_id(2) != 0)
    def _():
        o_ref[...] += partial           # later K steps: accumulate in resident tile


# ------------------------------------------------------------------ wrapper
def linear_signed_forward(x, w, *, tm_target=256, tn_target=256, tk_target=512,
                          cast_bf16=True):
    """x: [n, d_in]; w: torch-layout [d_out, d_in]  ->  [n, d_out] == x @ w.T."""
    n, d_in = x.shape
    d_out, d_in_w = w.shape
    assert d_in == d_in_w, (x.shape, w.shape)

    out_dtype = jnp.float32
    # bf16 MXU operands (native on v5e/v6e/v7x); numerics differ from f32 only
    # if inputs are not already on the bf16 grid.
    in_dtype = jnp.bfloat16 if cast_bf16 else jnp.float32
    x = x.astype(in_dtype)
    w = w.astype(in_dtype)
    itemsize = jnp.dtype(in_dtype).itemsize
    m_q = 16 if in_dtype == jnp.bfloat16 else 8   # sublane quantum (bf16 packs 2 rows)

    # Pad to hardware quanta; padded K contributes zeros, padded M/N is sliced off.
    n_pad = _round_up(n, m_q)
    dout_pad = _round_up(d_out, 128)
    din_pad = _round_up(d_in, 128)
    if (n_pad, din_pad) != (n, d_in):
        x = jnp.pad(x, ((0, n_pad - n), (0, din_pad - d_in)))
    if (dout_pad, din_pad) != (d_out, d_in):
        w = jnp.pad(w, ((0, dout_pad - d_out), (0, din_pad - d_in)))

    # Conservative VMEM budget (fits v5e's 16 MiB scoped default; far under
    # v7x's 64 MiB physical VMEM even with double buffering).
    budget = 12 << 20
    resident_w = dout_pad * din_pad * itemsize
    x_stripe = 2 * tm_target * din_pad * itemsize          # double-buffered full-K x tile
    out_tile = 2 * tm_target * dout_pad * 4                # double-buffered f32 out tile
    if resident_w + x_stripe + out_tile <= budget:
        # W is a single resident block: DMA'd exactly once, only x/out stream.
        tn, tk = dout_pad, din_pad
    elif (2 * din_pad * (tm_target + tn_target) * itemsize
          + 2 * tm_target * tn_target * 4) <= budget:
        # Collapse only the K axis: no accumulation loop, no tile revisits.
        tn = _pick_tile(dout_pad, tn_target, 128)
        tk = din_pad
    else:
        tn = _pick_tile(dout_pad, tn_target, 128)
        tk = _pick_tile(din_pad, tk_target, 128)
    tm = _pick_tile(n_pad, tm_target, m_q)

    # v7x has 2 TensorCores: keep >= 2 "parallel" grid steps when splittable.
    if (n_pad // tm) * (dout_pad // tn) == 1 and n_pad % (2 * m_q) == 0:
        tm = n_pad // 2

    grid = (n_pad // tm, dout_pad // tn, din_pad // tk)

    flops = 2 * n_pad * din_pad * dout_pad
    bytes_accessed = ((n_pad * din_pad + dout_pad * din_pad) * itemsize
                      + n_pad * dout_pad * 4)

    out = pl.pallas_call(
        _linear_kernel,
        out_shape=jax.ShapeDtypeStruct((n_pad, dout_pad), out_dtype),
        grid_spec=pltpu.PrefetchScalarGridSpec(
            num_scalar_prefetch=0,
            grid=grid,
            in_specs=[
                pl.BlockSpec((tm, tk), lambda i, j, k: (i, k)),   # x tile
                pl.BlockSpec((tn, tk), lambda i, j, k: (j, k)),   # W tile (torch layout)
            ],
            out_specs=pl.BlockSpec((tm, tn), lambda i, j, k: (i, j)),
        ),
        compiler_params=pltpu.CompilerParams(
            dimension_semantics=("parallel", "parallel", "arbitrary")),
        cost_estimate=pl.CostEstimate(
            flops=flops, transcendentals=0, bytes_accessed=bytes_accessed),
    )(x, w)

    if (n_pad, dout_pad) != (n, d_out):
        out = out[:n, :d_out]
    return out


# --------------------------------------------------------------------- main
if __name__ == "__main__":
    d = 256     # in/out features of nn.Linear(d, d, bias=False)
    n = 128     # batch

    key = jax.random.PRNGKey(0)
    kx, kw = jax.random.split(key)

    # Round inputs to the bf16 grid so the bf16-input / f32-accumulate MXU path
    # matches the float64 reference within the tolerance below.
    x = jax.random.normal(kx, (n, d), jnp.float32)
    x = x.astype(jnp.bfloat16).astype(jnp.float32)
    # The torch module zero-initializes W (output trivially zero); use small
    # random weights so the kernel computes something non-trivial.
    w = 0.05 * jax.random.normal(kw, (d, d), jnp.float32)   # torch layout [out, in]
    w = w.astype(jnp.bfloat16).astype(jnp.float32)

    out = jax.block_until_ready(linear_signed_forward(x, w))
    ref = np.asarray(x, np.float64) @ np.asarray(w, np.float64).T
    assert out.shape == (n, d), out.shape
    assert np.allclose(np.asarray(out, np.float64), ref, atol=1e-4, rtol=1e-4)

    # The module's actual __init__ zeros the weight -> output must be exactly 0.
    out0 = jax.block_until_ready(
        linear_signed_forward(x, jnp.zeros((d, d), jnp.float32)))
    assert np.allclose(np.asarray(out0), 0.0)

    # Non-aligned shape exercises the pad-and-slice path (no giant fallback blocks).
    n2, d2 = 40, 96
    x2 = jax.random.normal(jax.random.PRNGKey(1), (n2, d2), jnp.float32)
    x2 = x2.astype(jnp.bfloat16).astype(jnp.float32)
    w2 = 0.05 * jax.random.normal(jax.random.PRNGKey(2), (d2, d2), jnp.float32)
    w2 = w2.astype(jnp.bfloat16).astype(jnp.float32)
    out2 = jax.block_until_ready(linear_signed_forward(x2, w2))
    ref2 = np.asarray(x2, np.float64) @ np.asarray(w2, np.float64).T
    assert out2.shape == (n2, d2), out2.shape
    assert np.allclose(np.asarray(out2, np.float64), ref2, atol=1e-4, rtol=1e-4)

    print("KERNEL_OK")
</pallas_src>

<mosaic_0001>
module attributes {stable_mosaic.version = 11 : i64} {
  func.func @_linear_kernel(%arg0: i32, %arg1: i32, %arg2: i32, %arg3: memref<64x256xbf16, #tpu.memory_space<vmem>>, %arg4: memref<256x256xbf16, #tpu.memory_space<vmem>>, %arg5: memref<64x256xf32, #tpu.memory_space<vmem>>) attributes {dimension_semantics = [#tpu.dimension_semantics<parallel>, #tpu.dimension_semantics<parallel>, #tpu.dimension_semantics<arbitrary>], iteration_bounds = array<i64: 2, 1, 1>, scalar_prefetch = 0 : i64, scratch_operands = 0 : i64, tpu.core_type = #tpu.core_type<tc>, window_params = [{transform_indices = @transform_0, window_bounds = array<i64: 64, 256>}, {transform_indices = @transform_1, window_bounds = array<i64: 256, 256>}, {transform_indices = @transform_2, window_bounds = array<i64: 64, 256>}]} {
    %c0 = arith.constant 0 : index
    %c0_0 = arith.constant 0 : index
    %0 = vector.load %arg3[%c0, %c0_0] : memref<64x256xbf16, #tpu.memory_space<vmem>>, vector<64x256xbf16>
    %c0_1 = arith.constant 0 : index
    %c0_2 = arith.constant 0 : index
    %1 = vector.load %arg4[%c0_1, %c0_2] : memref<256x256xbf16, #tpu.memory_space<vmem>>, vector<256x256xbf16>
    %cst = arith.constant dense<0.000000e+00> : vector<64x256xf32>
    %2 = tpu.matmul %0, %1, %cst {dimension_numbers = #tpu.dot_dimension_numbers<[1], [1], [0], [0], [0, 0, 1, 0], [], []>} : vector<64x256xbf16>, vector<256x256xbf16>, vector<64x256xf32> -> vector<64x256xf32>
    %c0_i32 = arith.constant 0 : i32
    %3 = arith.cmpi eq, %arg2, %c0_i32 : i32
    %4 = arith.extui %3 : i1 to i32
    %c0_i32_3 = arith.constant 0 : i32
    %5 = arith.cmpi ne, %4, %c0_i32_3 : i32
    scf.if %5 {
      %c0_6 = arith.constant 0 : index
      %c0_7 = arith.constant 0 : index
      %9 = vector.load %arg5[%c0_6, %c0_7] : memref<64x256xf32, #tpu.memory_space<vmem>>, vector<64x256xf32>
      tpu.vector_store %arg5[%c0_6, %c0_7], %2 {strides = array<i32>} : memref<64x256xf32, #tpu.memory_space<vmem>>, vector<64x256xf32>,
    } else {
    }
    %c0_i32_4 = arith.constant 0 : i32
    %6 = arith.cmpi ne, %arg2, %c0_i32_4 : i32
    %7 = arith.extui %6 : i1 to i32
    %c0_i32_5 = arith.constant 0 : i32
    %8 = arith.cmpi ne, %7, %c0_i32_5 : i32
    scf.if %8 {
      %c0_6 = arith.constant 0 : index
      %c0_7 = arith.constant 0 : index
      %9 = vector.load %arg5[%c0_6, %c0_7] : memref<64x256xf32, #tpu.memory_space<vmem>>, vector<64x256xf32>
      %10 = arith.addf %9, %2 : vector<64x256xf32>
      %c0_8 = arith.constant 0 : index
      %c0_9 = arith.constant 0 : index
      %11 = vector.load %arg5[%c0_8, %c0_9] : memref<64x256xf32, #tpu.memory_space<vmem>>, vector<64x256xf32>
      tpu.vector_store %arg5[%c0_8, %c0_9], %10 {strides = array<i32>} : memref<64x256xf32, #tpu.memory_space<vmem>>, vector<64x256xf32>,
    } else {
    }
    return
  }
  func.func @transform_0(%arg0: i32, %arg1: i32, %arg2: i32) -> (i32, i32) {
    %c0_i32 = arith.constant 0 : i32
    return %arg0, %arg2 : i32, i32
  }
  func.func @transform_1(%arg0: i32, %arg1: i32, %arg2: i32) -> (i32, i32) {
    %c0_i32 = arith.constant 0 : i32
    return %arg1, %arg2 : i32, i32
  }
  func.func @transform_2(%arg0: i32, %arg1: i32, %arg2: i32) -> (i32, i32) {
    %c0_i32 = arith.constant 0 : i32
    return %arg0, %arg1 : i32, i32
  }
}

</mosaic_0001>

<llo_original>
// kernel: tpu_custom_call.1
$region0: #{tpu_custom_call.1}
  #allocation0 [shape = 'u32[]', space=smem, size = 0x4, offset = 0x4, fixed_abs, tag = 'smem constant byte address 0x4 - core index']
  #allocation1 [shape = 'u32[72,128]{1,0:T(1,128)}', space=vmem, size = 0x9000, scoped, tag = 'internal scratch']
  %s0 = inlined_call_operand.hbm [shape: bf16[128,256], index: 0, kind: input, shape index: {}]
  %s1 = inlined_call_operand.hbm [shape: bf16[256,256], index: 1, kind: input, shape index: {}]
  %s2 = inlined_call_operand.hbm [shape: f32[128,256], index: 2, kind: output, shape index: {}]
  %s3 = sld [smem:[#allocation0]]
  $region57: #{tpu_custom_call.1} parent=0
    _
  %s5 = ssub.s32 1, %s3
  %s6 = scalar_select 0, %s5, %s3
  $region1: #{tpu_custom_call.1} parent=0
    #allocation2 [shape = 'u8[65536]{0}', space=vmem, size = 0x10000, scoped, tag = 'input window, operand 0']
    #allocation3 [shape = 's32[2]{0}', space=sflag, size = 0x8, scoped, tag = 'scoped memory for tpu_custom_call.1']
    #allocation4 [shape = 's32[2]{0}', space=sflag, size = 0x8, scoped, tag = 'scoped memory for tpu_custom_call.1']
    #allocation5 [shape = 'u8[131072]{0}', space=vmem, size = 0x20000, scoped, tag = 'input window, operand 1, single buffered']
    #allocation6 [shape = 's32[1]{0}', space=sflag, size = 0x4, scoped, tag = 'scoped memory for tpu_custom_call.1']
    #allocation7 [shape = 'u8[131072]{0}', space=vmem, size = 0x20000, scoped, tag = 'output window, operand 0']
    %7 = vsyncpa [#allocation3], 0
    %s8 = scalar_lea.sflag [#allocation3], 1
    %9 = vsyncpa %s8, 0
    %10 = vsyncpa [#allocation6], 0
    %11 = vsyncpa [#allocation4], 0
    %s12 = scalar_lea.sflag [#allocation4], 1
    %13 = vsyncpa %s12, 0
    loop: start=0, step=1, limit=4
    $region2: #{tpu_custom_call.1} parent=1 // loop_pre_header
      _
    $region3: #{tpu_custom_call.1} parent=1 // loop_header
      %s15 = sphi 0, %s19
      %p16 = scmp.ge.s32.totalorder %s15, 4
      %s22 = sphi 0, %s41
      %s23 = sphi 0, %s37
      %s24 = sphi 0, %s33
      %s25 = sphi 0, %s22
      %s26 = sphi 0, %s23
      %s27 = sphi 0, %s24
      %s28 = sphi 0, %s25
      %s29 = sphi 0, %s26
      %s30 = sphi 0, %s27
      %s46 = sphi 0, %s48
      %s49 = sphi 0, %s46
      %s50 = sphi 0, %s49
      %s66 = sphi 0, %s50
      %s74 = sphi 0, %s76
      %s77 = sphi 0, %s74
      %s78 = sphi 0, %s77
      %s94 = sphi 0, %s78
      %s102 = sphi 0, %s104
      %s105 = sphi 0, %s102
      %s106 = sphi 0, %s105
      %s122 = sphi 0, %s106
    $region4: #{tpu_custom_call.1} parent=1 // loop_header_branch
      %18 = sbr.rel (%p16) target = $region8
    $region5: #{tpu_custom_call.1} parent=1 // loop_body
      %s20 = ssub.s32 %s15, 1
      %s21 = ssub.s32 %s15, 2
      %s31 = sadd.s32 1, %s24
      %p32 = scmp.ge.s32.totalorder %s31, 1
      %s33 = scalar_select %p32, 0, %s31
      %s34 = sadd.s32 1, %s23
      %s35 = scalar_select %p32, %s34, %s23
      %p36 = scmp.ge.s32.totalorder %s35, 1
      %s37 = scalar_select %p36, 0, %s35
      %s38 = sadd.s32 1, %s22
      %s39 = scalar_select %p36, %s38, %s22
      %p40 = scmp.ge.s32.totalorder %s39, 2
      %s41 = scalar_select %p40, 0, %s39
      %s42 = ssub.s32 %s22, %s41
      %s43 = ssub.s32 %s24, %s33
      %s44 = sor.u32 %s42, %s43
      %p45 = scmp.eq.s32.totalorder %s44, 0
      %s47 = sadd.s32 %s46, 1
      %s48 = scalar_select %p45, %s46, %s47
      %p51 = pneg %p45
      %p52 = scmp.eq.s32.totalorder %s15, 1
      %p53 = por %p51, %p52
      %p54 = scmp.ne.s32.totalorder %s46, %s49
      %p55 = scmp.eq.s32.totalorder %s15, 0
      %p56 = por %p54, %p55
      %p57 = scmp.ne.s32.totalorder %s46, %s49
      %p58 = scmp.eq.s32.totalorder %s20, 1
      %p59 = por %p57, %p58
      %p60 = scmp.ne.s32.totalorder %s49, %s50
      %p61 = scmp.eq.s32.totalorder %s20, 0
      %p62 = por %p60, %p61
      %p63 = scmp.ne.s32.totalorder %s49, %s50
      %p64 = scmp.eq.s32.totalorder %s21, 1
      %p65 = por %p63, %p64
      %p67 = scmp.ne.s32.totalorder %s50, %s66
      %p68 = scmp.eq.s32.totalorder %s21, 0
      %p69 = por %p67, %p68
      %s70 = ssub.s32 %s23, %s37
      %s71 = ssub.s32 %s24, %s33
      %s72 = sor.u32 %s70, %s71
      %p73 = scmp.eq.s32.totalorder %s72, 0
      %s75 = sadd.s32 %s74, 1
      %s76 = scalar_select %p73, %s74, %s75
      %p79 = pneg %p73
      %p80 = scmp.eq.s32.totalorder %s15, 1
      %p81 = por %p79, %p80
      %p82 = scmp.ne.s32.totalorder %s74, %s77
      %p83 = scmp.eq.s32.totalorder %s15, 0
      %p84 = por %p82, %p83
      %p85 = scmp.ne.s32.totalorder %s74, %s77
      %p86 = scmp.eq.s32.totalorder %s20, 1
      %p87 = por %p85, %p86
      %p88 = scmp.ne.s32.totalorder %s77, %s78
      %p89 = scmp.eq.s32.totalorder %s20, 0
      %p90 = por %p88, %p89
      %p91 = scmp.ne.s32.totalorder %s77, %s78
      %p92 = scmp.eq.s32.totalorder %s21, 1
      %p93 = por %p91, %p92
      %p95 = scmp.ne.s32.totalorder %s78, %s94
      %p96 = scmp.eq.s32.totalorder %s21, 0
      %p97 = por %p95, %p96
      %s98 = ssub.s32 %s22, %s41
      %s99 = ssub.s32 %s23, %s37
      %s100 = sor.u32 %s98, %s99
      %p101 = scmp.eq.s32.totalorder %s100, 0
      %s103 = sadd.s32 %s102, 1
      %s104 = scalar_select %p101, %s102, %s103
      %p107 = pneg %p101
      %p108 = scmp.eq.s32.totalorder %s15, 1
      %p109 = por %p107, %p108
      %p110 = scmp.ne.s32.totalorder %s102, %s105
      %p111 = scmp.eq.s32.totalorder %s15, 0
      %p112 = por %p110, %p111
      %p113 = scmp.ne.s32.totalorder %s102, %s105
      %p114 = scmp.eq.s32.totalorder %s20, 1
      %p115 = por %p113, %p114
      %p116 = scmp.ne.s32.totalorder %s105, %s106
      %p117 = scmp.eq.s32.totalorder %s20, 0
      %p118 = por %p116, %p117
      %p119 = scmp.ne.s32.totalorder %s105, %s106
      %p120 = scmp.eq.s32.totalorder %s21, 1
      %p121 = por %p119, %p120
      %p123 = scmp.ne.s32.totalorder %s106, %s122
      %p124 = scmp.eq.s32.totalorder %s21, 0
      %p125 = por %p123, %p124
      %p126 = scmp.le.s32.totalorder 1, %s15
      %p127 = scmp.lt.s32.totalorder %s15, 3
      %p128 = pnand %p126, %p127
      %p129 = pneg %p128
      // Predicated region
      $region9: #{tpu_custom_call.1} parent=5 // pred_check
        _
      $region10: #{tpu_custom_call.1} parent=5 // pred_check_branch
        %131 = sbr.rel (%p128) target = $region12
      $region11: #{tpu_custom_call.1} parent=5 // pred_region
        %s132 = ssub.s32 %s15, 1
        // Predicated region
        $region13: #{tpu_custom_call.1} parent=11 // pred_check
          %p133 = pneg %p90
        $region14: #{tpu_custom_call.1} parent=11 // pred_check_branch
          %135 = sbr.rel (%p133) target = $region16
        $region15: #{tpu_custom_call.1} parent=11 // pred_region
          %s136 = smul.u32 32, %s26
          %s137 = smul.u32 2, %s27
          %139 = vsyncadd [#allocation6], 0
          %s140 = smul.addr %s136, 2
          %s141 = sadd.s32 %s137, %s140
          %s142 = smul.addr %s141, 4
          %s143 = scalar_lea.hbm %s1, %s142
          %s144 = sshll.u32 %s143, 4
          %s145 = int_to_ptr.hbm [resolvable:$true] %s144
          %s146 = sshll.u32 [#allocation5], 4
          %s147 = int_to_ptr.vmem [resolvable:$true] %s146
          %152 = dma.hbm_to_vmem [thread:$0]  %s145, 4096, %s147, [#allocation6], 128, 128, 8
        $region16: #{tpu_custom_call.1} parent=11 // pred_fallthru
          _
      $region12: #{tpu_custom_call.1} parent=5 // pred_fallthru
        _
      %p153 = scmp.lt.s32.totalorder %s15, 2
      // Predicated region
      $region17: #{tpu_custom_call.1} parent=5 // pred_check
        %p154 = pneg %p153
      $region18: #{tpu_custom_call.1} parent=5 // pred_check_branch
        %156 = sbr.rel (%p154) target = $region20
      $region19: #{tpu_custom_call.1} parent=5 // pred_region
        // Predicated region
        $region21: #{tpu_custom_call.1} parent=19 // pred_check
          %p157 = pneg %p56
        $region22: #{tpu_custom_call.1} parent=19 // pred_check_branch
          %159 = sbr.rel (%p157) target = $region24
        $region23: #{tpu_custom_call.1} parent=19 // pred_region
          %s160 = sand.u32 %s46, 1
          %s161 = scalar_lea.sflag [#allocation3], %s160
          %s162 = sand.u32 %s46, 1
          %s163 = smul.addr %s162, 64
          %s164 = scalar_lea.vmem [#allocation2], %s163
          %s165 = smul.u32 8, %s22
          %s166 = smul.u32 2, %s24
          %168 = vsyncadd %s161, 0
          %s169 = smul.addr %s165, 2
          %s170 = sadd.s32 %s166, %s169
          %s171 = smul.addr %s170, 4
          %s172 = scalar_lea.hbm %s0, %s171
          %s173 = sshll.u32 %s172, 4
          %s174 = int_to_ptr.hbm [resolvable:$true] %s173
          %s175 = sshll.u32 %s164, 4
          %s176 = int_to_ptr.vmem [resolvable:$true] %s175
          %181 = dma.hbm_to_vmem [thread:$0]  %s174, 1024, %s176, %s161, 128, 128, 8
        $region24: #{tpu_custom_call.1} parent=19 // pred_fallthru
          _
      $region20: #{tpu_custom_call.1} parent=5 // pred_fallthru
        _
      %p182 = scmp.le.s32.totalorder 1, %s15
      %p183 = scmp.lt.s32.totalorder %s15, 3
      %p184 = pnand %p182, %p183
      %p185 = pneg %p184
      // Predicated region
      $region25: #{tpu_custom_call.1} parent=5 // pred_check
        _
      $region26: #{tpu_custom_call.1} parent=5 // pred_check_branch
        %187 = sbr.rel (%p184) target = $region28
      $region27: #{tpu_custom_call.1} parent=5 // pred_region
        %s188 = ssub.s32 %s15, 1
        %s189 = sand.u32 %s49, 1
        %s190 = scalar_lea.sflag [#allocation3], %s189
        %s191 = sand.u32 %s49, 1
        %s192 = smul.addr %s191, 64
        %s193 = scalar_lea.vmem [#allocation2], %s192
        // Predicated region
        $region29: #{tpu_custom_call.1} parent=27 // pred_check
          %p194 = pneg %p62
        $region30: #{tpu_custom_call.1} parent=27 // pred_check_branch
          %196 = sbr.rel (%p194) target = $region32
        $region31: #{tpu_custom_call.1} parent=27 // pred_region
          %198 = dma.done %s190, 1024
        $region32: #{tpu_custom_call.1} parent=27 // pred_fallthru
          _
        // Predicated region
        $region33: #{tpu_custom_call.1} parent=27 // pred_check
          %p199 = pneg %p90
        $region34: #{tpu_custom_call.1} parent=27 // pred_check_branch
          %201 = sbr.rel (%p199) target = $region36
        $region35: #{tpu_custom_call.1} parent=27 // pred_region
          %203 = dma.done [#allocation6], 4096
        $region36: #{tpu_custom_call.1} parent=27 // pred_fallthru
          _
        %s204 = sand.u32 %s49, 1
        %s205 = scalar_lea.sflag [#allocation3], %s204
        %s206 = sand.u32 %s49, 1
        %s207 = smul.addr %s206, 64
        %s208 = scalar_lea.vmem [#allocation2], %s207
        %p209 = pneg %p62
        %p210 = pneg %p59
        %p211 = pneg %p90
        %p212 = pneg %p87
        %p213 = pneg %p118
        %p214 = pneg %p115
        %s215 = sand.u32 %s105, 1
        %s216 = scalar_lea.sflag [#allocation4], %s215
        %s217 = sand.u32 %s105, 1
        %s218 = smul.addr %s217, 128
        %s219 = scalar_lea.vmem [#allocation7], %s218
        %s220 = smul.u32 8, %s25
        %s221 = smul.u32 2, %s27
        %s222 = smul.u32 32, %s26
        %s223 = smul.u32 2, %s27
        %s224 = smul.u32 8, %s25
        %s225 = smul.u32 2, %s26
        %v226 = vld [vmem:[%s193] sm:$0xff]
        %v227 = vld [vmem:[%s193 + $0x8] sm:$0xff]
        %v228 = vld [vmem:[%s193 + $0x10] sm:$0xff]
        %v229 = vld [vmem:[%s193 + $0x18] sm:$0xff]
        %v230 = vld [vmem:[%s193 + $0x20] sm:$0xff]
        %v231 = vld [vmem:[%s193 + $0x28] sm:$0xff]
        %v232 = vld [vmem:[%s193 + $0x30] sm:$0xff]
        %v233 = vld [vmem:[%s193 + $0x38] sm:$0xff]
        %v234 = vld [vmem:[#allocation5] sm:$0xff]
        %v235 = vld [vmem:[#allocation5 + $0x8] sm:$0xff]
        %v236 = vld [vmem:[#allocation5 + $0x10] sm:$0xff]
        %v237 = vld [vmem:[#allocation5 + $0x18] sm:$0xff]
        %v238 = vld [vmem:[#allocation5 + $0x20] sm:$0xff]
        %v239 = vld [vmem:[#allocation5 + $0x28] sm:$0xff]
        %v240 = vld [vmem:[#allocation5 + $0x30] sm:$0xff]
        %v241 = vld [vmem:[#allocation5 + $0x38] sm:$0xff]
        %v242 = vld [vmem:[#allocation5 + $0x40] sm:$0xff]
        %v243 = vld [vmem:[#allocation5 + $0x48] sm:$0xff]
        %v244 = vld [vmem:[#allocation5 + $0x50] sm:$0xff]
        %v245 = vld [vmem:[#allocation5 + $0x58] sm:$0xff]
        %v246 = vld [vmem:[#allocation5 + $0x60] sm:$0xff]
        %v247 = vld [vmem:[#allocation5 + $0x68] sm:$0xff]
        %v248 = vld [vmem:[#allocation5 + $0x70] sm:$0xff]
        %v249 = vld [vmem:[#allocation5 + $0x78] sm:$0xff]
        %v250 = vld [vmem:[#allocation5 + $0x80] sm:$0xff]
        %v251 = vld [vmem:[#allocation5 + $0x88] sm:$0xff]
        %v252 = vld [vmem:[#allocation5 + $0x90] sm:$0xff]
        %v253 = vld [vmem:[#allocation5 + $0x98] sm:$0xff]
        %v254 = vld [vmem:[#allocation5 + $0xa0] sm:$0xff]
        %v255 = vld [vmem:[#allocation5 + $0xa8] sm:$0xff]
        %v256 = vld [vmem:[#allocation5 + $0xb0] sm:$0xff]
        %v257 = vld [vmem:[#allocation5 + $0xb8] sm:$0xff]
        %v258 = vld [vmem:[#allocation5 + $0xc0] sm:$0xff]
        %v259 = vld [vmem:[#allocation5 + $0xc8] sm:$0xff]
        %v260 = vld [vmem:[#allocation5 + $0xd0] sm:$0xff]
        %v261 = vld [vmem:[#allocation5 + $0xd8] sm:$0xff]
        %v262 = vld [vmem:[#allocation5 + $0xe0] sm:$0xff]
        %v263 = vld [vmem:[#allocation5 + $0xe8] sm:$0xff]
        %v264 = vld [vmem:[#allocation5 + $0xf0] sm:$0xff]
        %v265 = vld [vmem:[#allocation5 + $0xf8] sm:$0xff]
        %v274 = vunpack.c.l.b16 %v226
        %v275 = vunpack.c.h.b16 %v226
        %v276 = vunpack.c.l.b16 %v227
        %v277 = vunpack.c.h.b16 %v227
        %v278 = vunpack.c.l.b16 %v228
        %v279 = vunpack.c.h.b16 %v228
        %v280 = vunpack.c.l.b16 %v229
        %v281 = vunpack.c.h.b16 %v229
        %v282 = vunpack.c.l.b16 %v230
        %v283 = vunpack.c.h.b16 %v230
        %v284 = vunpack.c.l.b16 %v231
        %v285 = vunpack.c.h.b16 %v231
        %v286 = vunpack.c.l.b16 %v232
        %v287 = vunpack.c.h.b16 %v232
        %v288 = vunpack.c.l.b16 %v233
        %v289 = vunpack.c.h.b16 %v233
        %v290 = vpack.c.b16 %v276, %v274
        %v291 = vpack.c.b16 %v277, %v275
        %v292 = vpack.c.b16 %v280, %v278
        %v293 = vpack.c.b16 %v281, %v279
        %v294 = vpack.c.b16 %v284, %v282
        %v295 = vpack.c.b16 %v285, %v283
        %v296 = vpack.c.b16 %v288, %v286
        %v297 = vpack.c.b16 %v289, %v287
        %v338 = vunpack.c.l.b16 %v234
        %v339 = vunpack.c.h.b16 %v234
        %v340 = vunpack.c.l.b16 %v235
        %v341 = vunpack.c.h.b16 %v235
        %v342 = vunpack.c.l.b16 %v236
        %v343 = vunpack.c.h.b16 %v236
        %v344 = vunpack.c.l.b16 %v237
        %v345 = vunpack.c.h.b16 %v237
        %v346 = vunpack.c.l.b16 %v238
        %v347 = vunpack.c.h.b16 %v238
        %v348 = vunpack.c.l.b16 %v239
        %v349 = vunpack.c.h.b16 %v239
        %v350 = vunpack.c.l.b16 %v240
        %v351 = vunpack.c.h.b16 %v240
        %v352 = vunpack.c.l.b16 %v241
        %v353 = vunpack.c.h.b16 %v241
        %v354 = vunpack.c.l.b16 %v242
        %v355 = vunpack.c.h.b16 %v242
        %v356 = vunpack.c.l.b16 %v243
        %v357 = vunpack.c.h.b16 %v243
        %v358 = vunpack.c.l.b16 %v244
        %v359 = vunpack.c.h.b16 %v244
        %v360 = vunpack.c.l.b16 %v245
        %v361 = vunpack.c.h.b16 %v245
        %v362 = vunpack.c.l.b16 %v246
        %v363 = vunpack.c.h.b16 %v246
        %v364 = vunpack.c.l.b16 %v247
        %v365 = vunpack.c.h.b16 %v247
        %v366 = vunpack.c.l.b16 %v248
        %v367 = vunpack.c.h.b16 %v248
        %v368 = vunpack.c.l.b16 %v249
        %v369 = vunpack.c.h.b16 %v249
        %v370 = vunpack.c.l.b16 %v250
        %v371 = vunpack.c.h.b16 %v250
        %v372 = vunpack.c.l.b16 %v251
        %v373 = vunpack.c.h.b16 %v251
        %v374 = vunpack.c.l.b16 %v252
        %v375 = vunpack.c.h.b16 %v252
        %v376 = vunpack.c.l.b16 %v253
        %v377 = vunpack.c.h.b16 %v253
        %v378 = vunpack.c.l.b16 %v254
        %v379 = vunpack.c.h.b16 %v254
        %v380 = vunpack.c.l.b16 %v255
        %v381 = vunpack.c.h.b16 %v255
        %v382 = vunpack.c.l.b16 %v256
        %v383 = vunpack.c.h.b16 %v256
        %v384 = vunpack.c.l.b16 %v257
        %v385 = vunpack.c.h.b16 %v257
        %v386 = vunpack.c.l.b16 %v258
        %v387 = vunpack.c.h.b16 %v258
        %v388 = vunpack.c.l.b16 %v259
        %v389 = vunpack.c.h.b16 %v259
        %v390 = vunpack.c.l.b16 %v260
        %v391 = vunpack.c.h.b16 %v260
        %v392 = vunpack.c.l.b16 %v261
        %v393 = vunpack.c.h.b16 %v261
        %v394 = vunpack.c.l.b16 %v262
        %v395 = vunpack.c.h.b16 %v262
        %v396 = vunpack.c.l.b16 %v263
        %v397 = vunpack.c.h.b16 %v263
        %v398 = vunpack.c.l.b16 %v264
        %v399 = vunpack.c.h.b16 %v264
        %v400 = vunpack.c.l.b16 %v265
        %v401 = vunpack.c.h.b16 %v265
        %v402 = vpack.c.b16 %v340, %v338
        %v403 = vpack.c.b16 %v341, %v339
        %v404 = vpack.c.b16 %v344, %v342
        %v405 = vpack.c.b16 %v345, %v343
        %v406 = vpack.c.b16 %v348, %v346
        %v407 = vpack.c.b16 %v349, %v347
        %v408 = vpack.c.b16 %v352, %v350
        %v409 = vpack.c.b16 %v353, %v351
        %v410 = vpack.c.b16 %v356, %v354
        %v411 = vpack.c.b16 %v357, %v355
        %v412 = vpack.c.b16 %v360, %v358
        %v413 = vpack.c.b16 %v361, %v359
        %v414 = vpack.c.b16 %v364, %v362
        %v415 = vpack.c.b16 %v365, %v363
        %v416 = vpack.c.b16 %v368, %v366
        %v417 = vpack.c.b16 %v369, %v367
        %v418 = vpack.c.b16 %v372, %v370
        %v419 = vpack.c.b16 %v373, %v371
        %v420 = vpack.c.b16 %v376, %v374
        %v421 = vpack.c.b16 %v377, %v375
        %v422 = vpack.c.b16 %v380, %v378
        %v423 = vpack.c.b16 %v381, %v379
        %v424 = vpack.c.b16 %v384, %v382
        %v425 = vpack.c.b16 %v385, %v383
        %v426 = vpack.c.b16 %v388, %v386
        %v427 = vpack.c.b16 %v389, %v387
        %v428 = vpack.c.b16 %v392, %v390
        %v429 = vpack.c.b16 %v393, %v391
        %v430 = vpack.c.b16 %v396, %v394
        %v431 = vpack.c.b16 %v397, %v395
        %v432 = vpack.c.b16 %v400, %v398
        %v433 = vpack.c.b16 %v401, %v399
        %466 = vmatpush.bf16.xpose.msra.mxu0 %v416
        %467 = vmatpush.bf16.xpose.msra.mxu0 %v414
        %468 = vmatpush.bf16.xpose.msra.mxu0 %v412
        %469 = vmatpush.bf16.xpose.msra.mxu0 %v410
        %470 = vmatpush.bf16.xpose.msra.mxu0 %v408
        %471 = vmatpush.bf16.xpose.msra.mxu0 %v406
        %472 = vmatpush.bf16.xpose.msra.mxu0 %v404
        %473 = vmatpush.bf16.xpose.msra.mxu0 %v402
        %474 = vmatmul.bf16.gmra.mxu0 %v290
        %v475 = vpop.f32.mrf.mxu0
        %v476 = vadd.f32 0.0, %v475
        %v477 = vpop.f32.mrf.mxu0
        %v478 = vadd.f32 0.0, %v477
        %479 = vmatmul.bf16.gmra.mxu0 %v292
        %v480 = vpop.f32.mrf.mxu0
        %v481 = vadd.f32 0.0, %v480
        %v482 = vpop.f32.mrf.mxu0
        %v483 = vadd.f32 0.0, %v482
        %484 = vmatmul.bf16.gmra.mxu0 %v294
        %v485 = vpop.f32.mrf.mxu0
        %v486 = vadd.f32 0.0, %v485
        %v487 = vpop.f32.mrf.mxu0
        %v488 = vadd.f32 0.0, %v487
        %489 = vmatmul.bf16.gmra.mxu0 %v296
        %v490 = vpop.f32.mrf.mxu0
        %v491 = vadd.f32 0.0, %v490
        %v492 = vpop.f32.mrf.mxu0
        %v493 = vadd.f32 0.0, %v492
        %494 = vdwg.mxu0
        %495 = vmatpush.bf16.xpose.msra.mxu0 %v417
        %496 = vmatpush.bf16.xpose.msra.mxu0 %v415
        %497 = vmatpush.bf16.xpose.msra.mxu0 %v413
        %498 = vmatpush.bf16.xpose.msra.mxu0 %v411
        %499 = vmatpush.bf16.xpose.msra.mxu0 %v409
        %500 = vmatpush.bf16.xpose.msra.mxu0 %v407
        %501 = vmatpush.bf16.xpose.msra.mxu0 %v405
        %502 = vmatpush.bf16.xpose.msra.mxu0 %v403
        %503 = vmatmul.bf16.gmra.mxu0 %v291
        %v504 = vpop.f32.mrf.mxu0
        %v505 = vadd.f32 %v476, %v504
        %v506 = vpop.f32.mrf.mxu0
        %v507 = vadd.f32 %v478, %v506
        %508 = vmatmul.bf16.gmra.mxu0 %v293
        %v509 = vpop.f32.mrf.mxu0
        %v510 = vadd.f32 %v481, %v509
        %v511 = vpop.f32.mrf.mxu0
        %v512 = vadd.f32 %v483, %v511
        %513 = vmatmul.bf16.gmra.mxu0 %v295
        %v514 = vpop.f32.mrf.mxu0
        %v515 = vadd.f32 %v486, %v514
        %v516 = vpop.f32.mrf.mxu0
        %v517 = vadd.f32 %v488, %v516
        %518 = vmatmul.bf16.gmra.mxu0 %v297
        %v519 = vpop.f32.mrf.mxu0
        %v520 = vadd.f32 %v491, %v519
        %v521 = vpop.f32.mrf.mxu0
        %v522 = vadd.f32 %v493, %v521
        %523 = vdwg.mxu0
        %524 = vmatpush.bf16.xpose.msra.mxu0 %v432
        %525 = vmatpush.bf16.xpose.msra.mxu0 %v430
        %526 = vmatpush.bf16.xpose.msra.mxu0 %v428
        %527 = vmatpush.bf16.xpose.msra.mxu0 %v426
        %528 = vmatpush.bf16.xpose.msra.mxu0 %v424
        %529 = vmatpush.bf16.xpose.msra.mxu0 %v422
        %530 = vmatpush.bf16.xpose.msra.mxu0 %v420
        %531 = vmatpush.bf16.xpose.msra.mxu0 %v418
        %532 = vmatmul.bf16.gmra.mxu0 %v290
        %v533 = vpop.f32.mrf.mxu0
        %v534 = vadd.f32 0.0, %v533
        %v535 = vpop.f32.mrf.mxu0
        %v536 = vadd.f32 0.0, %v535
        %537 = vmatmul.bf16.gmra.mxu0 %v292
        %v538 = vpop.f32.mrf.mxu0
        %v539 = vadd.f32 0.0, %v538
        %v540 = vpop.f32.mrf.mxu0
        %v541 = vadd.f32 0.0, %v540
        %542 = vmatmul.bf16.gmra.mxu0 %v294
        %v543 = vpop.f32.mrf.mxu0
        %v544 = vadd.f32 0.0, %v543
        %v545 = vpop.f32.mrf.mxu0
        %v546 = vadd.f32 0.0, %v545
        %547 = vmatmul.bf16.gmra.mxu0 %v296
        %v548 = vpop.f32.mrf.mxu0
        %v549 = vadd.f32 0.0, %v548
        %v550 = vpop.f32.mrf.mxu0
        %v551 = vadd.f32 0.0, %v550
        %552 = vdwg.mxu0
        %553 = vmatpush.bf16.xpose.msra.mxu0 %v433
        %554 = vmatpush.bf16.xpose.msra.mxu0 %v431
        %555 = vmatpush.bf16.xpose.msra.mxu0 %v429
        %556 = vmatpush.bf16.xpose.msra.mxu0 %v427
        %557 = vmatpush.bf16.xpose.msra.mxu0 %v425
        %558 = vmatpush.bf16.xpose.msra.mxu0 %v423
        %559 = vmatpush.bf16.xpose.msra.mxu0 %v421
        %560 = vmatpush.bf16.xpose.msra.mxu0 %v419
        %561 = vmatmul.bf16.gmra.mxu0 %v291
        %v562 = vpop.f32.mrf.mxu0
        %v563 = vadd.f32 %v534, %v562
        %v564 = vpop.f32.mrf.mxu0
        %v565 = vadd.f32 %v536, %v564
        %566 = vmatmul.bf16.gmra.mxu0 %v293
        %v567 = vpop.f32.mrf.mxu0
        %v568 = vadd.f32 %v539, %v567
        %v569 = vpop.f32.mrf.mxu0
        %v570 = vadd.f32 %v541, %v569
        %571 = vmatmul.bf16.gmra.mxu0 %v295
        %v572 = vpop.f32.mrf.mxu0
        %v573 = vadd.f32 %v544, %v572
        %v574 = vpop.f32.mrf.mxu0
        %v575 = vadd.f32 %v546, %v574
        %576 = vmatmul.bf16.gmra.mxu0 %v297
        %v577 = vpop.f32.mrf.mxu0
        %v578 = vadd.f32 %v549, %v577
        %v579 = vpop.f32.mrf.mxu0
        %v580 = vadd.f32 %v551, %v579
        %581 = vdwg.mxu0
        %p582 = scmp.eq.s32.totalorder %s27, 0
        // Predicated region
        $region37: #{tpu_custom_call.1} parent=27 // pred_check
          %p583 = pneg %p582
        $region38: #{tpu_custom_call.1} parent=27 // pred_check_branch
          %585 = sbr.rel (%p583) target = $region40
        $region39: #{tpu_custom_call.1} parent=27 // pred_region
          %586 = vst [vmem:[%s219] sm:$0xff] %v505
          %587 = vst [vmem:[%s219 + $0x8] sm:$0xff] %v563
          %588 = vst [vmem:[%s219 + $0x10] sm:$0xff] %v507
          %589 = vst [vmem:[%s219 + $0x18] sm:$0xff] %v565
          %590 = vst [vmem:[%s219 + $0x20] sm:$0xff] %v510
          %591 = vst [vmem:[%s219 + $0x28] sm:$0xff] %v568
          %592 = vst [vmem:[%s219 + $0x30] sm:$0xff] %v512
          %593 = vst [vmem:[%s219 + $0x38] sm:$0xff] %v570
          %594 = vst [vmem:[%s219 + $0x40] sm:$0xff] %v515
          %595 = vst [vmem:[%s219 + $0x48] sm:$0xff] %v573
          %596 = vst [vmem:[%s219 + $0x50] sm:$0xff] %v517
          %597 = vst [vmem:[%s219 + $0x58] sm:$0xff] %v575
          %598 = vst [vmem:[%s219 + $0x60] sm:$0xff] %v520
          %599 = vst [vmem:[%s219 + $0x68] sm:$0xff] %v578
          %600 = vst [vmem:[%s219 + $0x70] sm:$0xff] %v522
          %601 = vst [vmem:[%s219 + $0x78] sm:$0xff] %v580
        $region40: #{tpu_custom_call.1} parent=27 // pred_fallthru
          _
        %p602 = scmp.ne.s32.totalorder %s27, 0
        // Predicated region
        $region41: #{tpu_custom_call.1} parent=27 // pred_check
          %p603 = pneg %p602
        $region42: #{tpu_custom_call.1} parent=27 // pred_check_branch
          %605 = sbr.rel (%p603) target = $region44
        $region43: #{tpu_custom_call.1} parent=27 // pred_region
          %v606 = vld [vmem:[%s219] sm:$0xff]
          %v607 = vld [vmem:[%s219 + $0x8] sm:$0xff]
          %v608 = vld [vmem:[%s219 + $0x10] sm:$0xff]
          %v609 = vld [vmem:[%s219 + $0x18] sm:$0xff]
          %v610 = vld [vmem:[%s219 + $0x20] sm:$0xff]
          %v611 = vld [vmem:[%s219 + $0x28] sm:$0xff]
          %v612 = vld [vmem:[%s219 + $0x30] sm:$0xff]
          %v613 = vld [vmem:[%s219 + $0x38] sm:$0xff]
          %v614 = vld [vmem:[%s219 + $0x40] sm:$0xff]
          %v615 = vld [vmem:[%s219 + $0x48] sm:$0xff]
          %v616 = vld [vmem:[%s219 + $0x50] sm:$0xff]
          %v617 = vld [vmem:[%s219 + $0x58] sm:$0xff]
          %v618 = vld [vmem:[%s219 + $0x60] sm:$0xff]
          %v619 = vld [vmem:[%s219 + $0x68] sm:$0xff]
          %v620 = vld [vmem:[%s219 + $0x70] sm:$0xff]
          %v621 = vld [vmem:[%s219 + $0x78] sm:$0xff]
          %v622 = vadd.f32 %v606, %v505
          %v623 = vadd.f32 %v607, %v563
          %v624 = vadd.f32 %v608, %v507
          %v625 = vadd.f32 %v609, %v565
          %v626 = vadd.f32 %v610, %v510
          %v627 = vadd.f32 %v611, %v568
          %v628 = vadd.f32 %v612, %v512
          %v629 = vadd.f32 %v613, %v570
          %v630 = vadd.f32 %v614, %v515
          %v631 = vadd.f32 %v615, %v573
          %v632 = vadd.f32 %v616, %v517
          %v633 = vadd.f32 %v617, %v575
          %v634 = vadd.f32 %v618, %v520
          %v635 = vadd.f32 %v619, %v578
          %v636 = vadd.f32 %v620, %v522
          %v637 = vadd.f32 %v621, %v580
          %638 = vst [vmem:[%s219] sm:$0xff] %v622
          %639 = vst [vmem:[%s219 + $0x8] sm:$0xff] %v623
          %640 = vst [vmem:[%s219 + $0x10] sm:$0xff] %v624
          %641 = vst [vmem:[%s219 + $0x18] sm:$0xff] %v625
          %642 = vst [vmem:[%s219 + $0x20] sm:$0xff] %v626
          %643 = vst [vmem:[%s219 + $0x28] sm:$0xff] %v627
          %644 = vst [vmem:[%s219 + $0x30] sm:$0xff] %v628
          %645 = vst [vmem:[%s219 + $0x38] sm:$0xff] %v629
          %646 = vst [vmem:[%s219 + $0x40] sm:$0xff] %v630
          %647 = vst [vmem:[%s219 + $0x48] sm:$0xff] %v631
          %648 = vst [vmem:[%s219 + $0x50] sm:$0xff] %v632
          %649 = vst [vmem:[%s219 + $0x58] sm:$0xff] %v633
          %650 = vst [vmem:[%s219 + $0x60] sm:$0xff] %v634
          %651 = vst [vmem:[%s219 + $0x68] sm:$0xff] %v635
          %652 = vst [vmem:[%s219 + $0x70] sm:$0xff] %v636
          %653 = vst [vmem:[%s219 + $0x78] sm:$0xff] %v637
        $region44: #{tpu_custom_call.1} parent=27 // pred_fallthru
          _
        %s654 = sand.u32 %s105, 1
        %s655 = scalar_lea.sflag [#allocation4], %s654
        %s656 = sand.u32 %s105, 1
        %s657 = smul.addr %s656, 128
        %s658 = scalar_lea.vmem [#allocation7], %s657
        // Predicated region
        $region45: #{tpu_custom_call.1} parent=27 // pred_check
          %p659 = pneg %p115
        $region46: #{tpu_custom_call.1} parent=27 // pred_check_branch
          %661 = sbr.rel (%p659) target = $region48
        $region47: #{tpu_custom_call.1} parent=27 // pred_region
          %s662 = smul.u32 8, %s25
          %s663 = smul.u32 2, %s26
          %665 = vsyncadd %s655, 0
          %s666 = smul.addr %s662, 2
          %s667 = sadd.s32 %s663, %s666
          %s668 = smul.addr %s667, 8
          %s669 = scalar_lea.hbm %s2, %s668
          %s670 = sshll.u32 %s658, 4
          %s671 = int_to_ptr.vmem [resolvable:$true] %s670
          %s672 = sshll.u32 %s669, 4
          %s673 = int_to_ptr.hbm [resolvable:$true] %s672
          %678 = dma.vmem_to_hbm [thread:$0]  %s671, 2048, %s673, %s655, 256, 256, 16
        $region48: #{tpu_custom_call.1} parent=27 // pred_fallthru
          _
      $region28: #{tpu_custom_call.1} parent=5 // pred_fallthru
        _
      %p679 = scmp.le.s32.totalorder 2, %s15
      // Predicated region
      $region49: #{tpu_custom_call.1} parent=5 // pred_check
        %p680 = pneg %p679
      $region50: #{tpu_custom_call.1} parent=5 // pred_check_branch
        %682 = sbr.rel (%p680) target = $region52
      $region51: #{tpu_custom_call.1} parent=5 // pred_region
        %s683 = ssub.s32 %s15, 2
        // Predicated region
        $region53: #{tpu_custom_call.1} parent=51 // pred_check
          %p684 = pneg %p121
        $region54: #{tpu_custom_call.1} parent=51 // pred_check_branch
          %686 = sbr.rel (%p684) target = $region56
        $region55: #{tpu_custom_call.1} parent=51 // pred_region
          %s687 = sand.u32 %s106, 1
          %s688 = scalar_lea.sflag [#allocation4], %s687
          %s689 = sand.u32 %s106, 1
          %s690 = smul.addr %s689, 128
          %s691 = scalar_lea.vmem [#allocation7], %s690
          %693 = dma.done %s688, 2048
        $region56: #{tpu_custom_call.1} parent=51 // pred_fallthru
          _
      $region52: #{tpu_custom_call.1} parent=5 // pred_fallthru
        _
    $region6: #{tpu_custom_call.1} parent=1 // loop_footer
      %s19 = sadd.s32 1, %s15
    $region7: #{tpu_custom_call.1} parent=1 // loop_footer_branch
      %14 = sbr.rel target = $region3
    $region8: #{tpu_custom_call.1} parent=1 // loop_exit
      _
    %694 = vsyncpa [#allocation3], 1
    %s695 = scalar_lea.sflag [#allocation3], 1
    %696 = vsyncpa %s695, 1
    %697 = vsyncpa [#allocation6], 1
    %698 = vsyncpa [#allocation4], 1
    %s699 = scalar_lea.sflag [#allocation4], 1
    %700 = vsyncpa %s699, 1

</llo_original>
